<compile_context>
chip_gen: v6e
topology: v6e:2x2x1
jax: 0.10.0
libtpu: 0.0.40
codegen_flags: <defaults>
</compile_context>

<pallas_src>
import jax
import jax.numpy as jnp
from jax.experimental import pallas as pl
from jax.experimental.pallas import tpu as pltpu


def _allreduce_kernel(x_ref, out_ref, ploss_ref):
    """x_ref / out_ref: (r, TN, TD); ploss_ref: (1, 1, 1, 1) f32."""
    r = x_ref.shape[0]
    x = x_ref[...].astype(jnp.float32)            # (r, TN, TD), accumulate in f32
    s = jnp.sum(x, axis=0)                        # all-reduce over r -> (TN, TD)
    s_out = s.astype(out_ref.dtype)
    for i in range(r):                            # r is small & static: r plain stores
        out_ref[i] = s_out                        # avoids an (r, TN, TD) vreg broadcast
    # Per-tile partial loss; combined across tiles in the wrapper (keeps the grid
    # axes free of carried accumulators so they can be "parallel").
    ploss_ref[...] = jnp.full(ploss_ref.shape, jnp.sum(s * s), dtype=ploss_ref.dtype)


def _pick_tile(dim, unit, cap):
    """Largest tile <= cap that is a multiple of `unit` and divides `dim`,
    or the full dim if dim <= cap (always legal) / no aligned divisor exists."""
    if dim <= cap:
        return dim
    t = (cap // unit) * unit
    while t >= unit:
        if dim % t == 0:
            return t
        t -= unit
    return dim  # rare fallback: whole dim (still legal, grid axis becomes 1)


def _choose_tiles(r, n, d, itemsize, budget_bytes=24 * 1024 * 1024):
    """Tile (TN, TD) so that 2 buffers * (in + out) blocks fit the VMEM budget."""
    # per-(TN*TD)-element VMEM cost: 2 buffers * 2 arrays * r * itemsize
    bytes_per_elem = 4 * r * max(itemsize, 1)
    max_block_elems = max(budget_bytes // bytes_per_elem, 8 * 128)

    lane_unit = 128
    sub_unit = 8 * max(1, 4 // max(itemsize, 1))   # 8 for f32, 16 for bf16, 32 for i8

    td_cap = min(d, 1024, max(lane_unit, max_block_elems // sub_unit))
    td = _pick_tile(d, lane_unit, td_cap)
    tn_cap = min(n, 512, max(sub_unit, max_block_elems // td))
    tn = _pick_tile(n, sub_unit, tn_cap)
    return tn, td


def _all_reduce_reference(X_flat, replication_factor):
    """Pure-JAX reference (also the fast path for tiny inputs)."""
    r = replication_factor
    rn, d = X_flat.shape
    n = rn // r
    x3 = X_flat.reshape(r, n, d)
    s = jnp.sum(x3.astype(jnp.float32), axis=0)                 # (n, d)
    stacked = jnp.tile(s.astype(X_flat.dtype), (r, 1))          # (r*n, d)
    loss = jnp.full((r,), jnp.sum(s * s), dtype=jnp.float32).astype(X_flat.dtype)
    return stacked, loss


def all_reduce_simulator(X_flat: jax.Array, replication_factor: int, *, use_pallas=None):
    """X_flat: (r*n, d). Returns (vstacked out (r*n, d), loss (r,)),
    matching _AllReduceSimulator.forward()."""
    rn, d = X_flat.shape
    r = replication_factor
    assert rn % r == 0
    n = rn // r

    if use_pallas is None:
        # Tiny problems are dominated by pallas_call launch / DMA setup overhead;
        # let XLA fuse the sum + repeat instead.
        use_pallas = X_flat.size >= (1 << 16)
    if not use_pallas:
        return _all_reduce_reference(X_flat, r)

    x3 = X_flat.reshape(r, n, d)                 # einops '(r n) d -> r n d'
    itemsize = jnp.dtype(X_flat.dtype).itemsize
    tn, td = _choose_tiles(r, n, d, itemsize)
    gn, gd = n // tn, d // td

    cost = pl.CostEstimate(
        flops=(r + 1) * n * d,                   # (r-1) adds + square + add per element
        transcendentals=0,
        bytes_accessed=2 * r * n * d * itemsize + 4 * gn * gd,
    )

    out3, ploss = pl.pallas_call(
        _allreduce_kernel,
        grid=(gn, gd),
        in_specs=[pl.BlockSpec((r, tn, td), lambda i, j: (0, i, j))],
        out_specs=(
            pl.BlockSpec((r, tn, td), lambda i, j: (0, i, j)),
            pl.BlockSpec((1, 1, 1, 1), lambda i, j: (i, j, 0, 0)),
        ),
        out_shape=(
            jax.ShapeDtypeStruct((r, n, d), X_flat.dtype),
            jax.ShapeDtypeStruct((gn, gd, 1, 1), jnp.float32),
        ),
        compiler_params=pltpu.CompilerParams(
            dimension_semantics=("parallel", "parallel"),
            vmem_limit_bytes=32 * 1024 * 1024,
        ),
        cost_estimate=cost,
    )(x3)

    stacked = out3.reshape(rn, d)                # vstack([*out]) == contiguous reshape
    loss_scalar = jnp.sum(ploss)                 # combine per-tile partial losses (f32)
    loss = jnp.full((r,), loss_scalar, dtype=jnp.float32).astype(X_flat.dtype)
    return stacked, loss


if __name__ == "__main__":
    # small deterministic example: r=2, n=8, d=32 => X_flat is (16, 32)
    replication_factor = 2
    n, d = 8, 32
    key = jax.random.PRNGKey(0)
    X_flat = jax.random.normal(key, (replication_factor * n, d), dtype=jnp.float32)

    # force the Pallas path so the kernel actually runs at this tiny size
    stacked, loss = all_reduce_simulator(X_flat, replication_factor, use_pallas=True)
    stacked = jax.block_until_ready(stacked)
    loss = jax.block_until_ready(loss)

    ref_stacked, ref_loss = _all_reduce_reference(X_flat, replication_factor)

    assert stacked.shape == (replication_factor * n, d)
    assert loss.shape == (replication_factor,)
    assert jnp.allclose(stacked, ref_stacked, atol=1e-5, rtol=1e-5)
    assert jnp.allclose(loss, ref_loss, atol=1e-3, rtol=1e-5)

    print("KERNEL_OK")
</pallas_src>

<mosaic_0001>
module attributes {stable_mosaic.version = 11 : i64} {
  func.func @_allreduce_kernel(%arg0: i32, %arg1: i32, %arg2: memref<2x8x32xf32, #tpu.memory_space<vmem>>, %arg3: memref<2x8x32xf32, #tpu.memory_space<vmem>>, %arg4: memref<1x1x1x1xf32, #tpu.memory_space<vmem>>) attributes {dimension_semantics = [#tpu.dimension_semantics<parallel>, #tpu.dimension_semantics<parallel>], iteration_bounds = array<i64: 1, 1>, scalar_prefetch = 0 : i64, scratch_operands = 0 : i64, tpu.core_type = #tpu.core_type<tc>, window_params = [{transform_indices = @transform_0, window_bounds = array<i64: 2, 8, 32>}, {transform_indices = @transform_1, window_bounds = array<i64: 2, 8, 32>}, {transform_indices = @transform_2, window_bounds = array<i64: 1, 1, 1, 1>}]} {
    %c0 = arith.constant 0 : index
    %c0_0 = arith.constant 0 : index
    %c0_1 = arith.constant 0 : index
    %0 = vector.load %arg2[%c0, %c0_0, %c0_1] : memref<2x8x32xf32, #tpu.memory_space<vmem>>, vector<2x8x32xf32>
    %cst = arith.constant dense<0.000000e+00> : vector<8x32xf32>
    %1 = vector.multi_reduction <add>, %0, %cst [0] : vector<2x8x32xf32> to vector<8x32xf32>
    %c0_2 = arith.constant 0 : index
    %c0_3 = arith.constant 0 : index
    %c0_4 = arith.constant 0 : index
    %2 = vector.load %arg3[%c0_2, %c0_3, %c0_4] : memref<2x8x32xf32, #tpu.memory_space<vmem>>, vector<1x8x32xf32>
    %3 = vector.shape_cast %2 : vector<1x8x32xf32> to vector<8x32xf32>
    %4 = vector.shape_cast %1 : vector<8x32xf32> to vector<1x8x32xf32>
    tpu.vector_store %arg3[%c0_2, %c0_3, %c0_4], %4 {strides = array<i32>} : memref<2x8x32xf32, #tpu.memory_space<vmem>>, vector<1x8x32xf32>,
    %c1 = arith.constant 1 : index
    %c0_5 = arith.constant 0 : index
    %c0_6 = arith.constant 0 : index
    %5 = vector.load %arg3[%c1, %c0_5, %c0_6] : memref<2x8x32xf32, #tpu.memory_space<vmem>>, vector<1x8x32xf32>
    %6 = vector.shape_cast %5 : vector<1x8x32xf32> to vector<8x32xf32>
    %7 = vector.shape_cast %1 : vector<8x32xf32> to vector<1x8x32xf32>
    tpu.vector_store %arg3[%c1, %c0_5, %c0_6], %7 {strides = array<i32>} : memref<2x8x32xf32, #tpu.memory_space<vmem>>, vector<1x8x32xf32>,
    %8 = arith.mulf %1, %1 : vector<8x32xf32>
    %9 = vector.shape_cast %8 : vector<8x32xf32> to vector<1x8x32xf32>
    %cst_7 = arith.constant dense<0.000000e+00> : vector<1xf32>
    %10 = vector.multi_reduction <add>, %9, %cst_7 [1, 2] : vector<1x8x32xf32> to vector<1xf32>
    %11 = vector.shape_cast %10 : vector<1xf32> to vector<1x1x1xf32>
    %12 = vector.extract %11[0, 0, 0] : f32 from vector<1x1x1xf32>
    %13 = vector.broadcast %12 : f32 to vector<1x1x1x1xf32>
    %c0_8 = arith.constant 0 : index
    %c0_9 = arith.constant 0 : index
    %c0_10 = arith.constant 0 : index
    %c0_11 = arith.constant 0 : index
    %14 = vector.load %arg4[%c0_8, %c0_9, %c0_10, %c0_11] : memref<1x1x1x1xf32, #tpu.memory_space<vmem>>, vector<1x1x1x1xf32>
    tpu.vector_store %arg4[%c0_8, %c0_9, %c0_10, %c0_11], %13 {strides = array<i32>} : memref<1x1x1x1xf32, #tpu.memory_space<vmem>>, vector<1x1x1x1xf32>,
    return
  }
  func.func @transform_0(%arg0: i32, %arg1: i32) -> (i32, i32, i32) {
    %c0_i32 = arith.constant 0 : i32
    %c0_i32_0 = arith.constant 0 : i32
    return %c0_i32, %arg0, %arg1 : i32, i32, i32
  }
  func.func @transform_1(%arg0: i32, %arg1: i32) -> (i32, i32, i32) {
    %c0_i32 = arith.constant 0 : i32
    %c0_i32_0 = arith.constant 0 : i32
    return %c0_i32, %arg0, %arg1 : i32, i32, i32
  }
  func.func @transform_2(%arg0: i32, %arg1: i32) -> (i32, i32, i32, i32) {
    %c0_i32 = arith.constant 0 : i32
    %c0_i32_0 = arith.constant 0 : i32
    %c0_i32_1 = arith.constant 0 : i32
    return %arg0, %arg1, %c0_i32, %c0_i32_0 : i32, i32, i32, i32
  }
}

</mosaic_0001>

<llo_original>
// kernel: tpu_custom_call.1
$region0: #{tpu_custom_call.1}
  #allocation0 [shape = 'u32[]', space=smem, size = 0x4, offset = 0x4, fixed_abs, tag = 'smem constant byte address 0x4 - core index']
  #allocation1 [shape = 'u32[144,128]{1,0:T(1,128)}', space=vmem, size = 0x12000, scoped, tag = 'internal scratch']
  %s0 = inlined_call_operand.hbm [shape: f32[2,8,32], index: 0, kind: input, shape index: {}]
  %s1 = inlined_call_operand.hbm [shape: f32[2,8,32], index: 1, kind: output, shape index: {0}]
  %s2 = inlined_call_operand.hbm [shape: f32[1,1,1,1], index: 2, kind: output, shape index: {1}]
  %3 = xla_tuple %s1, %s2
  %s4 = sld [smem:[#allocation0]]
  $region26: #{tpu_custom_call.1} parent=0
    _
  %s6 = ssub.s32 1, %s4
  %s7 = scalar_select 0, %s6, %s4
  $region1: #{tpu_custom_call.1} parent=0
    #allocation2 [shape = 'u8[8192]{0}', space=vmem, size = 0x2000, scoped, tag = 'input window, operand 0, single buffered']
    #allocation3 [shape = 's32[1]{0}', space=sflag, size = 0x4, scoped, tag = 'scoped memory for tpu_custom_call.1']
    #allocation4 [shape = 's32[1]{0}', space=sflag, size = 0x4, scoped, tag = 'scoped memory for tpu_custom_call.1']
    #allocation5 [shape = 'u8[8192]{0}', space=vmem, size = 0x2000, scoped, tag = 'output window, operand 0, single buffered']
    #allocation6 [shape = 'u8[512]{0}', space=vmem, size = 0x400, scoped, tag = 'output window, operand 1, single buffered']
    #allocation7 [shape = 's32[1]{0}', space=sflag, size = 0x4, scoped, tag = 'scoped memory for tpu_custom_call.1']
    %8 = vsyncpa [#allocation3], 0
    %9 = vsyncpa [#allocation4], 0
    %10 = vsyncpa [#allocation7], 0
    // Predicated region
    $region2: #{tpu_custom_call.1} parent=1 // pred_check
      _
    $region3: #{tpu_custom_call.1} parent=1 // pred_check_branch
      %12 = sbr.rel (0) target = $region5
    $region4: #{tpu_custom_call.1} parent=1 // pred_region
      %s14 = ssub.s32 256, 256
      %15 = vsyncadd [#allocation3], %s14
      %s16 = sshll.u32 [#allocation2], 4
      %s17 = int_to_ptr.vmem [resolvable:$true] %s16
      %22 = dma.hbm_to_vmem [thread:$0]  %s0, 256, %s17, [#allocation3], 128, 128, 8
    $region5: #{tpu_custom_call.1} parent=1 // pred_fallthru
      _
    // Predicated region
    $region6: #{tpu_custom_call.1} parent=1 // pred_check
      _
    $region7: #{tpu_custom_call.1} parent=1 // pred_check_branch
      %24 = sbr.rel (0) target = $region9
    $region8: #{tpu_custom_call.1} parent=1 // pred_region
      %25 = dma.done [#allocation3], 256
    $region9: #{tpu_custom_call.1} parent=1 // pred_fallthru
      _
    %v26 = vld [vmem:[#allocation2] sm:$0xff]
    %v27 = vld [vmem:[#allocation2 + $0x8] sm:$0xff]
    %vm28 = vcmask 261120
    %v29 = vsel %vm28, %v26, 0.0
    %v30 = vsel %vm28, %v27, 0.0
    %v31 = vadd.f32 %v29, %v30
    %32 = vst.msk [vmem:[#allocation5] sm:$0xff] %vm28, %v31
    %s33 = scalar_lea.vmem [#allocation5], 8
    %34 = vst.msk [vmem:[%s33] sm:$0xff] %vm28, %v31
    %v35 = vmul.f32 %v31, %v31
    %v36 = vsel %vm28, %v35, 0.0
    %37 = vadd.xlane.f32.xlu0 %v36
    %v38 = vpop.xlane.xlu0 %37
    %v39 = vrot.slane %v38, 4
    %v40 = vadd.f32 %v38, %v39
    %v41 = vrot.slane %v40, 2
    %v42 = vadd.f32 %v40, %v41
    %v43 = vrot.slane %v42, 1
    %v44 = vadd.f32 %v42, %v43
    %s45 = vtos %v44
    %v46 = vstv %s45
    %vm47 = vcmask 0
    %48 = vst.msk [vmem:[#allocation6] sm:$0x1] %vm47, %v46
    // Predicated region
    $region10: #{tpu_custom_call.1} parent=1 // pred_check
      _
    $region11: #{tpu_custom_call.1} parent=1 // pred_check_branch
      %50 = sbr.rel (0) target = $region13
    $region12: #{tpu_custom_call.1} parent=1 // pred_region
      %s52 = ssub.s32 256, 256
      %53 = vsyncadd [#allocation4], %s52
      %s54 = sshll.u32 [#allocation5], 4
      %s55 = int_to_ptr.vmem [resolvable:$true] %s54
      %60 = dma.vmem_to_hbm [thread:$0]  %s55, 256, %s1, [#allocation4], 128, 128, 8
    $region13: #{tpu_custom_call.1} parent=1 // pred_fallthru
      _
    // Predicated region
    $region14: #{tpu_custom_call.1} parent=1 // pred_check
      _
    $region15: #{tpu_custom_call.1} parent=1 // pred_check_branch
      %62 = sbr.rel (0) target = $region17
    $region16: #{tpu_custom_call.1} parent=1 // pred_region
      %s64 = ssub.s32 16, 16
      %65 = vsyncadd [#allocation7], %s64
      %s67 = sshll.u32 [#allocation6], 4
      %s68 = int_to_ptr.vmem [resolvable:$true] %s67
      %70 = dma.vmem_to_hbm [thread:$0]  %s68, 16, %s2, [#allocation7]
    $region17: #{tpu_custom_call.1} parent=1 // pred_fallthru
      _
    // Predicated region
    $region18: #{tpu_custom_call.1} parent=1 // pred_check
      _
    $region19: #{tpu_custom_call.1} parent=1 // pred_check_branch
      %72 = sbr.rel (0) target = $region21
    $region20: #{tpu_custom_call.1} parent=1 // pred_region
      %73 = dma.done [#allocation4], 256
    $region21: #{tpu_custom_call.1} parent=1 // pred_fallthru
      _
    // Predicated region
    $region22: #{tpu_custom_call.1} parent=1 // pred_check
      _
    $region23: #{tpu_custom_call.1} parent=1 // pred_check_branch
      %75 = sbr.rel (0) target = $region25
    $region24: #{tpu_custom_call.1} parent=1 // pred_region
      %76 = dma.done [#allocation7], 16
    $region25: #{tpu_custom_call.1} parent=1 // pred_fallthru
      _
    %77 = vsyncpa [#allocation3], 1
    %78 = vsyncpa [#allocation4], 1
    %79 = vsyncpa [#allocation7], 1

</llo_original>
